<compile_context>
chip_gen: v7x
topology: tpu7x:2x2x1
jax: 0.10.0
libtpu: 0.0.40
codegen_flags: <defaults>
</compile_context>

<pallas_src>
import functools
import math

import jax
import jax.numpy as jnp
from jax import lax
from jax.experimental import pallas as pl
from jax.experimental.pallas import tpu as pltpu


def _round_up(x, m):
    return ((x + m - 1) // m) * m


def _lsl_kernel(x_ref, t_ref, o_ref, *, smoothing, confidence, const_a,
                p_sum, ignore_index):
    """Closed-form label-smoothing KL.

    loss[b] = sum_j p_j * (log p_j - lsm_j)
            = const_a - sum_j p_j * x_j + p_sum * logsumexp(x)
    with  sum_j p_j * x_j = smoothing * sum_j x_j
                            + (confidence - smoothing) * x[target]
                            - smoothing * x[ignore_index]   (if ignore col set)
    const_a / p_sum are trace-time constants with the p>0 guards already
    folded in (never multiply a zero probability by log(0)).
    """
    x = x_ref[...].astype(jnp.float32)          # (tm, V), cast in-kernel
    tgt = t_ref[...]                            # (tm, 1) int32
    tm, v = x.shape
    col = lax.broadcasted_iota(jnp.int32, (tm, v), 1)
    t_cap = jnp.where(tgt == ignore_index, 0, tgt)

    # logsumexp over the full (unpadded) vocab block.
    m = jnp.max(x, axis=-1, keepdims=True)
    lse = m + jnp.log(jnp.sum(jnp.exp(x - m), axis=-1, keepdims=True))

    # sum_j p_j * x_j via two (three) lane reductions — no (tm,V) temporaries
    # for p / logp / lsm / kl.
    s_x = jnp.sum(x, axis=-1, keepdims=True)
    x_t = jnp.sum(jnp.where(col == t_cap, x, 0.0), axis=-1, keepdims=True)
    px = smoothing * s_x + (confidence - smoothing) * x_t
    if ignore_index >= 0:
        x_ign = jnp.sum(jnp.where(col == ignore_index, x, 0.0), axis=-1,
                        keepdims=True)
        px = px - smoothing * x_ign

    loss = (const_a - px) + p_sum * lse
    mask = (tgt != ignore_index).astype(jnp.float32)            # (tm, 1)
    o_ref[...] = loss * mask


def label_smoothing_loss(output, target, *, label_smoothing, tgt_vocab_size,
                         ignore_index=-1):
    """output: (B, V) logits (any float dtype); target: (B,) ids -> (B,) loss."""
    assert 0.0 <= label_smoothing <= 1.0
    B, V = output.shape
    assert V == tgt_vocab_size

    if ignore_index >= 0:
        smoothing = label_smoothing / (tgt_vocab_size - 2)
    else:
        smoothing = label_smoothing / (tgt_vocab_size - 1)
    confidence = 1.0 - label_smoothing

    # Trace-time constants of the closed form (p>0 guards folded in).
    n_smooth = tgt_vocab_size - 1 - (1 if ignore_index >= 0 else 0)
    const_a = ((smoothing * math.log(smoothing)) if smoothing > 0.0 else 0.0) \
        * n_smooth
    const_a += (confidence * math.log(confidence)) if confidence > 0.0 else 0.0
    p_sum = smoothing * n_smooth + confidence       # total target mass (== 1)

    # --- tiling policy ------------------------------------------------------
    itemsize = jnp.dtype(output.dtype).itemsize
    bytes_per_row = max(V * itemsize, 1)
    if B <= 8:
        tm = B                                      # one block == tiny batch
    else:
        # ~2 MiB of native-dtype logits per grid step (near HBM roofline),
        # row tile a multiple of 8, never larger than the batch.
        tm = max(8, ((2 << 20) // bytes_per_row) // 8 * 8)
        tm = min(tm, (B // 8) * 8, 4096)
        # Keep >= 4 grid steps when the batch allows: enables double-buffered
        # pipelining and gives both v7x TensorCores work.
        if B >= 32:
            tm = min(tm, _round_up(pl.cdiv(B, 4), 8))
        tm = max(tm, 8)
    grid = pl.cdiv(B, tm)            # ragged last block: OOB writes are masked

    t2 = target.astype(jnp.int32).reshape(B, 1)

    # VMEM budget: 2x double-buffered native-dtype tile + generous room for the
    # in-kernel f32 working set (cast/exp temporaries); capped well under
    # v7x's 64 MiB physical VMEM, floor at the common scoped default.
    tile_native = tm * V * itemsize
    tile_f32 = tm * V * 4
    vmem_limit = int(min(max(2 * tile_native + 6 * tile_f32 + (1 << 20),
                             16 << 20),
                         40 << 20))

    kernel = functools.partial(
        _lsl_kernel,
        smoothing=float(smoothing),
        confidence=float(confidence),
        const_a=float(const_a),
        p_sum=float(p_sum),
        ignore_index=int(ignore_index))

    out = pl.pallas_call(
        kernel,
        out_shape=jax.ShapeDtypeStruct((B, 1), jnp.float32),
        grid_spec=pltpu.PrefetchScalarGridSpec(
            num_scalar_prefetch=0,
            grid=(grid,),
            in_specs=[
                pl.BlockSpec((tm, V), lambda i: (i, 0)),   # logits, native dtype
                pl.BlockSpec((tm, 1), lambda i: (i, 0)),   # target ids
            ],
            out_specs=pl.BlockSpec((tm, 1), lambda i: (i, 0)),
        ),
        compiler_params=pltpu.CompilerParams(
            dimension_semantics=("parallel",),
            vmem_limit_bytes=vmem_limit),
    )(output, t2)

    return out[:, 0].astype(output.dtype)


def label_smoothing_loss_ref(output, target, *, label_smoothing,
                             tgt_vocab_size, ignore_index=-1):
    """Pure-JAX reference mirroring the PyTorch module."""
    if ignore_index >= 0:
        smoothing = label_smoothing / (tgt_vocab_size - 2)
    else:
        smoothing = label_smoothing / (tgt_vocab_size - 1)
    confidence = 1.0 - label_smoothing
    B, V = output.shape
    s_target = jnp.full((B, V), smoothing, jnp.float32)
    if ignore_index >= 0:
        s_target = s_target.at[:, ignore_index].set(0.0)
    t_cap = jnp.where(target == ignore_index, 0, target)
    s_target = s_target.at[jnp.arange(B), t_cap].set(confidence)
    lsm = jax.nn.log_softmax(output.astype(jnp.float32), axis=-1)
    kl = jnp.where(s_target > 0, s_target * (jnp.log(s_target) - lsm), 0.0)
    mask = (target != ignore_index).astype(kl.dtype)
    return (jnp.sum(kl, axis=-1) * mask).astype(output.dtype)


if __name__ == "__main__":
    key = jax.random.PRNGKey(0)
    k1, k2, k3, k4 = jax.random.split(key, 4)

    # Cases 1 & 2: small batch/vocab, f32 logits, with / without ignore_index.
    batch, vocab = 8, 32
    ls = 0.1
    logits = jax.random.normal(k1, (batch, vocab), jnp.float32)
    target = jax.random.randint(k2, (batch,), 0, vocab, dtype=jnp.int32)
    target = target.at[3].set(0)   # one row hits the ignore_index path below

    out = label_smoothing_loss(logits, target, label_smoothing=ls,
                               tgt_vocab_size=vocab, ignore_index=0)
    out = jax.block_until_ready(out)
    ref = label_smoothing_loss_ref(logits, target, label_smoothing=ls,
                                   tgt_vocab_size=vocab, ignore_index=0)
    assert out.shape == (batch,) and out.dtype == logits.dtype
    assert jnp.allclose(out, ref, atol=1e-5, rtol=1e-5)

    out2 = label_smoothing_loss(logits, target, label_smoothing=ls,
                                tgt_vocab_size=vocab, ignore_index=-1)
    out2 = jax.block_until_ready(out2)
    ref2 = label_smoothing_loss_ref(logits, target, label_smoothing=ls,
                                    tgt_vocab_size=vocab, ignore_index=-1)
    assert jnp.allclose(out2, ref2, atol=1e-5, rtol=1e-5)

    # Case 3: ragged batch (not a multiple of the row tile), vocab that is not
    # a multiple of 128, bf16 logits (native-dtype path, no wrapper copies).
    b3, v3 = 13, 160
    x3 = jax.random.normal(k3, (b3, v3), jnp.bfloat16)
    t3 = jax.random.randint(k4, (b3,), 0, v3, dtype=jnp.int32)
    t3 = t3.at[5].set(2)           # one row hits ignore_index=2
    out3 = label_smoothing_loss(x3, t3, label_smoothing=0.2,
                                tgt_vocab_size=v3, ignore_index=2)
    out3 = jax.block_until_ready(out3)
    ref3 = label_smoothing_loss_ref(x3, t3, label_smoothing=0.2,
                                    tgt_vocab_size=v3, ignore_index=2)
    assert out3.shape == (b3,) and out3.dtype == x3.dtype
    assert jnp.allclose(out3.astype(jnp.float32), ref3.astype(jnp.float32),
                        atol=2e-2, rtol=2e-2)

    print("KERNEL_OK")
</pallas_src>

<mosaic_0001>
module attributes {stable_mosaic.version = 11 : i64} {
  func.func @_lsl_kernel(%arg0: i32, %arg1: memref<8x32xf32, #tpu.memory_space<vmem>>, %arg2: memref<8x1xi32, #tpu.memory_space<vmem>>, %arg3: memref<8x1xf32, #tpu.memory_space<vmem>>) attributes {dimension_semantics = [#tpu.dimension_semantics<parallel>], iteration_bounds = array<i64: 1>, scalar_prefetch = 0 : i64, scratch_operands = 0 : i64, tpu.core_type = #tpu.core_type<tc>, window_params = [{transform_indices = @transform_0, window_bounds = array<i64: 8, 32>}, {transform_indices = @transform_1, window_bounds = array<i64: 8, 1>}, {transform_indices = @transform_2, window_bounds = array<i64: 8, 1>}]} {
    %c0 = arith.constant 0 : index
    %c0_0 = arith.constant 0 : index
    %0 = vector.load %arg1[%c0, %c0_0] : memref<8x32xf32, #tpu.memory_space<vmem>>, vector<8x32xf32>
    %c0_1 = arith.constant 0 : index
    %c0_2 = arith.constant 0 : index
    %1 = vector.load %arg2[%c0_1, %c0_2] : memref<8x1xi32, #tpu.memory_space<vmem>>, vector<8x1xi32>
    %2 = tpu.iota {dimensions = array<i32: 1>} : vector<8x32xi32>
    %c0_i32 = arith.constant 0 : i32
    %3 = vector.broadcast %c0_i32 : i32 to vector<8x1xi32>
    %4 = arith.cmpi eq, %1, %3 : vector<8x1xi32>
    %c0_i32_3 = arith.constant 0 : i32
    %5 = vector.broadcast %c0_i32_3 : i32 to vector<8x1xi32>
    %6 = arith.select %4, %5, %1 : vector<8x1xi1>, vector<8x1xi32>
    %cst = arith.constant dense<0xFF800000> : vector<8xf32>
    %7 = vector.multi_reduction <maximumf>, %0, %cst [1] : vector<8x32xf32> to vector<8xf32>
    %8 = vector.shape_cast %7 : vector<8xf32> to vector<8x1xf32>
    %9 = vector.broadcast %8 : vector<8x1xf32> to vector<8x32xf32>
    %10 = arith.subf %0, %9 : vector<8x32xf32>
    %11 = math.exp %10 : vector<8x32xf32>
    %cst_4 = arith.constant dense<0.000000e+00> : vector<8xf32>
    %12 = vector.multi_reduction <add>, %11, %cst_4 [1] : vector<8x32xf32> to vector<8xf32>
    %13 = vector.shape_cast %12 : vector<8xf32> to vector<8x1xf32>
    %14 = math.log %13 : vector<8x1xf32>
    %15 = arith.addf %8, %14 : vector<8x1xf32>
    %cst_5 = arith.constant dense<0.000000e+00> : vector<8xf32>
    %16 = vector.multi_reduction <add>, %0, %cst_5 [1] : vector<8x32xf32> to vector<8xf32>
    %17 = vector.shape_cast %16 : vector<8xf32> to vector<8x1xf32>
    %18 = vector.broadcast %6 : vector<8x1xi32> to vector<8x32xi32>
    %19 = arith.cmpi eq, %2, %18 : vector<8x32xi32>
    %cst_6 = arith.constant 0.000000e+00 : f32
    %20 = vector.broadcast %cst_6 : f32 to vector<8x32xf32>
    %21 = arith.select %19, %0, %20 : vector<8x32xi1>, vector<8x32xf32>
    %cst_7 = arith.constant dense<0.000000e+00> : vector<8xf32>
    %22 = vector.multi_reduction <add>, %21, %cst_7 [1] : vector<8x32xf32> to vector<8xf32>
    %23 = vector.shape_cast %22 : vector<8xf32> to vector<8x1xf32>
    %cst_8 = arith.constant 0.00333333341 : f32
    %24 = vector.broadcast %cst_8 : f32 to vector<8x1xf32>
    %25 = arith.mulf %24, %17 : vector<8x1xf32>
    %cst_9 = arith.constant 0.896666646 : f32
    %26 = vector.broadcast %cst_9 : f32 to vector<8x1xf32>
    %27 = arith.mulf %26, %23 : vector<8x1xf32>
    %28 = arith.addf %25, %27 : vector<8x1xf32>
    %c0_i32_10 = arith.constant 0 : i32
    %29 = vector.broadcast %c0_i32_10 : i32 to vector<8x32xi32>
    %30 = arith.cmpi eq, %2, %29 : vector<8x32xi32>
    %cst_11 = arith.constant 0.000000e+00 : f32
    %31 = vector.broadcast %cst_11 : f32 to vector<8x32xf32>
    %32 = arith.select %30, %0, %31 : vector<8x32xi1>, vector<8x32xf32>
    %cst_12 = arith.constant dense<0.000000e+00> : vector<8xf32>
    %33 = vector.multi_reduction <add>, %32, %cst_12 [1] : vector<8x32xf32> to vector<8xf32>
    %34 = vector.shape_cast %33 : vector<8xf32> to vector<8x1xf32>
    %cst_13 = arith.constant 0.00333333341 : f32
    %35 = vector.broadcast %cst_13 : f32 to vector<8x1xf32>
    %36 = arith.mulf %35, %34 : vector<8x1xf32>
    %37 = arith.subf %28, %36 : vector<8x1xf32>
    %cst_14 = arith.constant -0.665202737 : f32
    %38 = vector.broadcast %cst_14 : f32 to vector<8x1xf32>
    %39 = arith.subf %38, %37 : vector<8x1xf32>
    %cst_15 = arith.constant 1.000000e+00 : f32
    %40 = vector.broadcast %cst_15 : f32 to vector<8x1xf32>
    %41 = arith.mulf %40, %15 : vector<8x1xf32>
    %42 = arith.addf %39, %41 : vector<8x1xf32>
    %c0_i32_16 = arith.constant 0 : i32
    %43 = vector.broadcast %c0_i32_16 : i32 to vector<8x1xi32>
    %44 = arith.cmpi ne, %1, %43 : vector<8x1xi32>
    %45 = arith.extui %44 : vector<8x1xi1> to vector<8x1xi32>
    %46 = arith.sitofp %45 : vector<8x1xi32> to vector<8x1xf32>
    %47 = arith.mulf %42, %46 : vector<8x1xf32>
    %c0_17 = arith.constant 0 : index
    %c0_18 = arith.constant 0 : index
    %48 = vector.load %arg3[%c0_17, %c0_18] : memref<8x1xf32, #tpu.memory_space<vmem>>, vector<8x1xf32>
    tpu.vector_store %arg3[%c0_17, %c0_18], %47 {strides = array<i32>} : memref<8x1xf32, #tpu.memory_space<vmem>>, vector<8x1xf32>,
    return
  }
  func.func @transform_0(%arg0: i32) -> (i32, i32) {
    %c0_i32 = arith.constant 0 : i32
    %c0_i32_0 = arith.constant 0 : i32
    return %arg0, %c0_i32 : i32, i32
  }
  func.func @transform_1(%arg0: i32) -> (i32, i32) {
    %c0_i32 = arith.constant 0 : i32
    %c0_i32_0 = arith.constant 0 : i32
    return %arg0, %c0_i32 : i32, i32
  }
  func.func @transform_2(%arg0: i32) -> (i32, i32) {
    %c0_i32 = arith.constant 0 : i32
    %c0_i32_0 = arith.constant 0 : i32
    return %arg0, %c0_i32 : i32, i32
  }
}

</mosaic_0001>

<llo_original>
// kernel: tpu_custom_call.1
$region0: #{tpu_custom_call.1}
  #allocation0 [shape = 'u32[]', space=smem, size = 0x4, offset = 0x4, fixed_abs, tag = 'smem constant byte address 0x4 - core index']
  #allocation1 [shape = 'u32[144,128]{1,0:T(1,128)}', space=vmem, size = 0x12000, scoped, tag = 'internal scratch']
  %s0 = inlined_call_operand.vmem [shape: f32[8,32], index: 0, kind: input, shape index: {}]
  %s1 = inlined_call_operand.vmem [shape: s32[8,1], index: 1, kind: input, shape index: {}]
  %s2 = inlined_call_operand.vmem [shape: f32[8,1], index: 2, kind: output, shape index: {}]
  %s3 = sld [smem:[#allocation0]]
  $region18: #{tpu_custom_call.1} parent=0
    _
  %s5 = ssub.s32 1, %s3
  %s6 = scalar_select 0, %s5, %s3
  // Predicated region
  $region2: #{tpu_custom_call.1} parent=0 // pred_check
    _
  $region3: #{tpu_custom_call.1} parent=0 // pred_check_branch
    %8 = sbr.rel (0) target = $region5
  $region4: #{tpu_custom_call.1} parent=0 // pred_region
    _
  $region5: #{tpu_custom_call.1} parent=0 // pred_fallthru
    _
  // Predicated region
  $region6: #{tpu_custom_call.1} parent=0 // pred_check
    _
  $region7: #{tpu_custom_call.1} parent=0 // pred_check_branch
    %10 = sbr.rel (0) target = $region9
  $region8: #{tpu_custom_call.1} parent=0 // pred_region
    _
  $region9: #{tpu_custom_call.1} parent=0 // pred_fallthru
    _
  %v11 = vld [vmem:[%s0] sm:$0xff]
  %v12 = vld [vmem:[%s1] sm:$0xff]
  %v13 = vlaneseq
  %v14 = vand.u32 %v13, 127
  %vm15 = vcmask 261120
  %v16 = vsel %vm15, %v11, -inf
  %17 = vmax.xlane.f32.xlu0 %v16
  %v18 = vpop.xlane.xlu0 %17
  %v19 = vsub.f32 %v11, %v18
  %v20 = vmul.f32 %v19, 1.442695
  %v21 = vpow.pop %v20
  %v22 = vsel %vm15, %v21, 0.0
  %23 = vadd.xlane.f32.xlu0 %v22
  %v24 = vpop.xlane.xlu0 %23
  %v25 = vlog2.pop %v24
  %v26 = vmul.f32 %v25, 0.6931472
  %v27 = vadd.f32 %v18, %v26
  %v28 = vsel %vm15, %v11, 0.0
  %29 = vadd.xlane.f32.xlu0 %v28
  %v30 = vpop.xlane.xlu0 %29
  %31 = vset.pattern.permute.xlu0 0
  %32 = vperm.xlu0 %31, %v12
  %v33 = vpop.permute.xlu0 %32
  %vm34 = vcmp.eq.s32.totalorder %v14, %v33
  %v35 = vsel %vm34, %v11, 0.0
  %v36 = vsel %vm15, %v35, 0.0
  %37 = vadd.xlane.f32.xlu0 %v36
  %v38 = vpop.xlane.xlu0 %37
  %v39 = vmul.f32 %v30, 0.0033333334
  %v40 = vmul.f32 %v38, 0.89666665
  %v41 = vadd.f32 %v39, %v40
  %vm42 = vcmp.eq.s32.totalorder %v14, 0
  %v43 = vsel %vm42, %v11, 0.0
  %v44 = vsel %vm15, %v43, 0.0
  %45 = vadd.xlane.f32.xlu0 %v44
  %v46 = vpop.xlane.xlu0 %45
  %v47 = vmul.f32 %v46, 0.0033333334
  %v48 = vsub.f32 %v41, %v47
  %v49 = vsub.f32 -0.66520274, %v48
  %v50 = vadd.f32 %v49, %v27
  %vm51 = vcmp.ne.s32.totalorder %v12, 0
  %v52 = vsel %vm51, 1, 0
  %v53 = vcvt.s32.f32 %v52
  %v54 = vmul.f32 %v50, %v53
  %vm55 = vcmask 7168
  %56 = vst.msk [vmem:[%s2] sm:$0xff] %vm55, %v54
  // Predicated region
  $region10: #{tpu_custom_call.1} parent=0 // pred_check
    _
  $region11: #{tpu_custom_call.1} parent=0 // pred_check_branch
    %58 = sbr.rel (0) target = $region13
  $region12: #{tpu_custom_call.1} parent=0 // pred_region
    _
  $region13: #{tpu_custom_call.1} parent=0 // pred_fallthru
    _
  // Predicated region
  $region14: #{tpu_custom_call.1} parent=0 // pred_check
    _
  $region15: #{tpu_custom_call.1} parent=0 // pred_check_branch
    %60 = sbr.rel (0) target = $region17
  $region16: #{tpu_custom_call.1} parent=0 // pred_region
    _
  $region17: #{tpu_custom_call.1} parent=0 // pred_fallthru
    _

</llo_original>
